<compile_context>
chip_gen: v7x
topology: tpu7x:2x2x1
jax: 0.10.0
libtpu: 0.0.40
codegen_flags: <defaults>
</compile_context>

<pallas_src>
import jax
import jax.numpy as jnp
from jax import lax
from jax.experimental import pallas as pl
from jax.experimental.pallas import tpu as pltpu

_MIB = 1024 * 1024


def _round_up(x: int, m: int) -> int:
    return ((x + m - 1) // m) * m


def _vmem_limit_bytes() -> int:
    """~3/4 of physical VMEM, capped at 96 MiB (96 MiB on v5e/v6e, 48 MiB on v7x)."""
    cap = 64 * _MIB
    try:
        cap = int(getattr(pltpu.get_tpu_info(), "vmem_capacity_bytes", cap))
    except Exception:
        pass
    return min(96 * _MIB, (cap // 4) * 3)


def _block_spec(shape, index_map, buffers=None):
    """BlockSpec with optional deeper pipelining (graceful fallback on older jax)."""
    if buffers is not None:
        try:
            return pl.BlockSpec(shape, index_map, pipeline_mode=pl.Buffered(buffers))
        except (TypeError, AttributeError):
            pass
    return pl.BlockSpec(shape, index_map)


# ---------------------------------------------------------------------------
# Kernels: one (tm, tn) output tile.  x tile is (tm, tk) bf16, w tile is
# (tn, tk) bf16 (native nn.Linear layout); contraction over the shared K axis
# via NT dot_general -> MXU, f32 accumulation.
# ---------------------------------------------------------------------------
def _linear_sn_kernel_f32out(sig_ref, x_ref, w_ref, b_ref, o_ref):
    """f32 output: accumulate directly into the resident output block."""
    k = pl.program_id(2)

    @pl.when(k == 0)
    def _():
        o_ref[...] = jnp.zeros_like(o_ref)

    o_ref[...] += lax.dot_general(
        x_ref[...],
        w_ref[...],
        dimension_numbers=(((1,), (1,)), ((), ())),  # x @ w.T on the MXU
        preferred_element_type=jnp.float32,
    )

    @pl.when(k == pl.num_programs(2) - 1)
    def _():
        o_ref[...] = o_ref[...] * sig_ref[0] + b_ref[...]


def _linear_sn_kernel_acc(sig_ref, x_ref, w_ref, b_ref, o_ref, acc_ref):
    """Generic output dtype: f32 VMEM accumulator, cast in the epilogue."""
    k = pl.program_id(2)

    @pl.when(k == 0)
    def _():
        acc_ref[...] = jnp.zeros_like(acc_ref)

    acc_ref[...] += lax.dot_general(
        x_ref[...],
        w_ref[...],
        dimension_numbers=(((1,), (1,)), ((), ())),
        preferred_element_type=jnp.float32,
    )

    @pl.when(k == pl.num_programs(2) - 1)
    def _():
        o_ref[...] = (acc_ref[...] * sig_ref[0] + b_ref[...]).astype(o_ref.dtype)


def _spectral_sigma(weight: jax.Array, u: jax.Array) -> jax.Array:
    """One power-iteration step + sigma (matches torch spectral_norm train fwd)."""
    eps = 1e-12
    v = weight.T @ u
    v = v / (jnp.linalg.norm(v) + eps)
    u_new = weight @ v
    u_new = u_new / (jnp.linalg.norm(u_new) + eps)
    return jnp.dot(u_new, weight @ v)


def cond_spectral_linear(inputs, weight, bias, u):
    """Pallas implementation of CondSpectralLinear.forward((img, label)).

    img:    (batch, in_features)
    weight: (out_features, in_features)   (PyTorch nn.Linear layout)
    bias:   (out_features,) or None
    u:      (out_features,)  spectral-norm power-iteration buffer
    """
    img, label = inputs
    M, K = img.shape
    N, K2 = weight.shape
    assert K == K2, "weight / input feature mismatch"
    out_dtype = img.dtype

    # --- spectral-norm scale (tiny matvecs, plain JAX) ----------------------
    # TODO(synk): torch's spectral_norm updates the `u` buffer in place during
    # training forwards and skips the iteration in eval mode; this functional
    # version recomputes sigma each call and does not return the updated u.
    sigma = _spectral_sigma(weight, u)
    inv_sigma = (1.0 / sigma).astype(jnp.float32).reshape(1)

    # --- operands: bf16 for the MXU (f32 accumulation happens in-kernel) ----
    x = img.astype(jnp.bfloat16)
    w = weight.astype(jnp.bfloat16)            # keep (N, K): no HBM transpose
    b = jnp.zeros((N,), jnp.float32) if bias is None else bias.astype(jnp.float32)

    # --- tile selection -----------------------------------------------------
    tm = min(256, _round_up(M, 8))
    Mp = _round_up(M, tm)

    Np = _round_up(N, 128)                     # lane-dense output (>= 128 wide)
    tn = next(t for t in (512, 256, 128) if Np % t == 0)
    # v7x has 2 TensorCores: keep >= 2 "parallel" output tiles if batch gives 1.
    if Mp // tm == 1 and Np // tn < 2 and Np >= 256:
        tn = next(t for t in (256, 128) if Np % t == 0 and Np // t >= 2)

    if K <= 1024:                              # full-K block: legal & no padding
        tk, Kp = K, K
    else:
        Kp = _round_up(K, 128)
        tk = next(t for t in (1024, 512, 256, 128) if Kp % t == 0)

    # --- pad only when a dim is not already a tile multiple ------------------
    x_p = x if (Mp == M and Kp == K) else jnp.pad(x, ((0, Mp - M), (0, Kp - K)))
    w_p = w if (Np == N and Kp == K) else jnp.pad(w, ((0, Np - N), (0, Kp - K)))
    b_p = (b if Np == N else jnp.pad(b, (0, Np - N))).reshape(1, Np)

    grid = (Mp // tm, Np // tn, Kp // tk)

    if jnp.dtype(out_dtype) == jnp.dtype(jnp.float32):
        kernel, scratch = _linear_sn_kernel_f32out, []
    else:
        kernel, scratch = _linear_sn_kernel_acc, [pltpu.VMEM((tm, tn), jnp.float32)]

    cost = pl.CostEstimate(
        flops=2 * Mp * Np * Kp,
        transcendentals=0,
        bytes_accessed=(Mp * Kp + Np * Kp) * 2
        + Mp * Np * jnp.dtype(out_dtype).itemsize
        + Np * 4,
    )

    def _build(deep_buffering: bool):
        buf = 3 if deep_buffering else None
        return pl.pallas_call(
            kernel,
            out_shape=jax.ShapeDtypeStruct((Mp, Np), out_dtype),
            grid_spec=pltpu.PrefetchScalarGridSpec(
                num_scalar_prefetch=1,          # 1/sigma lands in SMEM
                grid=grid,
                in_specs=[
                    _block_spec((tm, tk), lambda i, j, k, s: (i, k), buf),
                    _block_spec((tn, tk), lambda i, j, k, s: (j, k), buf),
                    pl.BlockSpec((1, tn), lambda i, j, k, s: (0, j)),
                ],
                out_specs=pl.BlockSpec((tm, tn), lambda i, j, k, s: (i, j)),
                scratch_shapes=scratch,
            ),
            compiler_params=pltpu.CompilerParams(
                dimension_semantics=("parallel", "parallel", "arbitrary"),
                vmem_limit_bytes=_vmem_limit_bytes(),
            ),
            cost_estimate=cost,
        )

    try:
        out_p = _build(True)(inv_sigma, x_p, w_p, b_p)
    except Exception:
        # Fallback for jax builds without BlockSpec pipeline_mode / pl.Buffered.
        out_p = _build(False)(inv_sigma, x_p, w_p, b_p)

    out = out_p if (Mp == M and Np == N) else out_p[:M, :N]
    # label is passed through unchanged (no compute).
    return out, label


if __name__ == "__main__":
    key = jax.random.PRNGKey(0)
    k_img, k_lab, k_w, k_b, k_u = jax.random.split(key, 5)

    # Small shapes consistent with the module: batch=8, in=32, out=64.
    batch, in_features, out_features = 8, 32, 64
    img = jax.random.normal(k_img, (batch, in_features), dtype=jnp.float32)
    label = jax.random.randint(k_lab, (batch,), 0, 10, dtype=jnp.int32)
    weight = 0.1 * jax.random.normal(
        k_w, (out_features, in_features), dtype=jnp.float32
    )
    bias = 0.1 * jax.random.normal(k_b, (out_features,), dtype=jnp.float32)
    u = jax.random.normal(k_u, (out_features,), dtype=jnp.float32)
    u = u / jnp.linalg.norm(u)

    out, lab = cond_spectral_linear((img, label), weight, bias, u)
    out = jax.block_until_ready(out)
    lab = jax.block_until_ready(lab)

    # Pure-JAX f32 reference (same power-iteration + spectral-normalized linear).
    eps = 1e-12
    v_ref = weight.T @ u
    v_ref = v_ref / (jnp.linalg.norm(v_ref) + eps)
    u_ref = weight @ v_ref
    u_ref = u_ref / (jnp.linalg.norm(u_ref) + eps)
    sigma_ref = jnp.dot(u_ref, weight @ v_ref)
    ref = img @ (weight / sigma_ref).T + bias

    assert out.shape == (batch, out_features) and out.dtype == img.dtype
    # Tolerance loosened vs the pure-f32 version: MXU operands are bf16
    # (accumulation stays f32), so operand rounding is ~1e-3..1e-2 relative.
    assert jnp.allclose(out, ref, atol=2e-2, rtol=2e-2)
    assert jnp.array_equal(lab, label)

    print("KERNEL_OK")
</pallas_src>

<mosaic_0001>
module attributes {stable_mosaic.version = 11 : i64} {
  func.func @_linear_sn_kernel_f32out(%arg0: i32, %arg1: i32, %arg2: i32, %arg3: memref<1xf32, #tpu.memory_space<smem>>, %arg4: memref<8x32xbf16, #tpu.memory_space<vmem>>, %arg5: memref<128x32xbf16, #tpu.memory_space<vmem>>, %arg6: memref<1x128xf32, #tpu.memory_space<vmem>>, %arg7: memref<8x128xf32, #tpu.memory_space<vmem>>) attributes {dimension_semantics = [#tpu.dimension_semantics<parallel>, #tpu.dimension_semantics<parallel>, #tpu.dimension_semantics<arbitrary>], iteration_bounds = array<i64: 1, 1, 1>, scalar_prefetch = 1 : i64, scratch_operands = 0 : i64, tpu.core_type = #tpu.core_type<tc>, window_params = [{transform_indices = @transform_0, window_bounds = array<i64: 8, 32>}, {transform_indices = @transform_1, window_bounds = array<i64: 128, 32>}, {transform_indices = @transform_2, window_bounds = array<i64: 1, 128>}, {transform_indices = @transform_3, window_bounds = array<i64: 8, 128>}]} {
    %c0_i32 = arith.constant 0 : i32
    %0 = arith.cmpi eq, %arg2, %c0_i32 : i32
    %1 = arith.extui %0 : i1 to i32
    %c0_i32_0 = arith.constant 0 : i32
    %2 = arith.cmpi ne, %1, %c0_i32_0 : i32
    scf.if %2 {
      %cst_10 = arith.constant 0.000000e+00 : f32
      %12 = vector.broadcast %cst_10 : f32 to vector<8x128xf32>
      %c0_11 = arith.constant 0 : index
      %c0_12 = arith.constant 0 : index
      %13 = vector.load %arg7[%c0_11, %c0_12] : memref<8x128xf32, #tpu.memory_space<vmem>>, vector<8x128xf32>
      tpu.vector_store %arg7[%c0_11, %c0_12], %12 {strides = array<i32>} : memref<8x128xf32, #tpu.memory_space<vmem>>, vector<8x128xf32>,
    } else {
    }
    %c0 = arith.constant 0 : index
    %c0_1 = arith.constant 0 : index
    %3 = vector.load %arg7[%c0, %c0_1] : memref<8x128xf32, #tpu.memory_space<vmem>>, vector<8x128xf32>
    %c0_2 = arith.constant 0 : index
    %c0_3 = arith.constant 0 : index
    %4 = vector.load %arg4[%c0_2, %c0_3] : memref<8x32xbf16, #tpu.memory_space<vmem>>, vector<8x32xbf16>
    %c0_4 = arith.constant 0 : index
    %c0_5 = arith.constant 0 : index
    %5 = vector.load %arg5[%c0_4, %c0_5] : memref<128x32xbf16, #tpu.memory_space<vmem>>, vector<128x32xbf16>
    %cst = arith.constant dense<0.000000e+00> : vector<8x128xf32>
    %6 = tpu.matmul %4, %5, %cst {dimension_numbers = #tpu.dot_dimension_numbers<[1], [1], [0], [0], [0, 0, 1, 0], [], []>} : vector<8x32xbf16>, vector<128x32xbf16>, vector<8x128xf32> -> vector<8x128xf32>
    %7 = arith.addf %3, %6 : vector<8x128xf32>
    %c0_6 = arith.constant 0 : index
    %c0_7 = arith.constant 0 : index
    %8 = vector.load %arg7[%c0_6, %c0_7] : memref<8x128xf32, #tpu.memory_space<vmem>>, vector<8x128xf32>
    tpu.vector_store %arg7[%c0_6, %c0_7], %7 {strides = array<i32>} : memref<8x128xf32, #tpu.memory_space<vmem>>, vector<8x128xf32>,
    %c0_i32_8 = arith.constant 0 : i32
    %9 = arith.cmpi eq, %arg2, %c0_i32_8 : i32
    %10 = arith.extui %9 : i1 to i32
    %c0_i32_9 = arith.constant 0 : i32
    %11 = arith.cmpi ne, %10, %c0_i32_9 : i32
    scf.if %11 {
      %c0_10 = arith.constant 0 : index
      %c0_11 = arith.constant 0 : index
      %12 = vector.load %arg7[%c0_10, %c0_11] : memref<8x128xf32, #tpu.memory_space<vmem>>, vector<8x128xf32>
      %c0_12 = arith.constant 0 : index
      %13 = memref.load %arg3[%c0_12] : memref<1xf32, #tpu.memory_space<smem>>
      %14 = vector.broadcast %13 : f32 to vector<8x128xf32>
      %15 = arith.mulf %12, %14 : vector<8x128xf32>
      %c0_13 = arith.constant 0 : index
      %c0_14 = arith.constant 0 : index
      %16 = vector.load %arg6[%c0_13, %c0_14] : memref<1x128xf32, #tpu.memory_space<vmem>>, vector<1x128xf32>
      %17 = vector.broadcast %16 : vector<1x128xf32> to vector<8x128xf32>
      %18 = arith.addf %15, %17 : vector<8x128xf32>
      %c0_15 = arith.constant 0 : index
      %c0_16 = arith.constant 0 : index
      %19 = vector.load %arg7[%c0_15, %c0_16] : memref<8x128xf32, #tpu.memory_space<vmem>>, vector<8x128xf32>
      tpu.vector_store %arg7[%c0_15, %c0_16], %18 {strides = array<i32>} : memref<8x128xf32, #tpu.memory_space<vmem>>, vector<8x128xf32>,
    } else {
    }
    return
  }
  func.func @transform_0(%arg0: i32, %arg1: i32, %arg2: i32, %arg3: memref<1xf32, #tpu.memory_space<smem>>) -> (i32, i32) {
    %c0_i32 = arith.constant 0 : i32
    return %arg0, %arg2 : i32, i32
  }
  func.func @transform_1(%arg0: i32, %arg1: i32, %arg2: i32, %arg3: memref<1xf32, #tpu.memory_space<smem>>) -> (i32, i32) {
    %c0_i32 = arith.constant 0 : i32
    return %arg1, %arg2 : i32, i32
  }
  func.func @transform_2(%arg0: i32, %arg1: i32, %arg2: i32, %arg3: memref<1xf32, #tpu.memory_space<smem>>) -> (i32, i32) {
    %c0_i32 = arith.constant 0 : i32
    %c0_i32_0 = arith.constant 0 : i32
    return %c0_i32, %arg1 : i32, i32
  }
  func.func @transform_3(%arg0: i32, %arg1: i32, %arg2: i32, %arg3: memref<1xf32, #tpu.memory_space<smem>>) -> (i32, i32) {
    %c0_i32 = arith.constant 0 : i32
    return %arg0, %arg1 : i32, i32
  }
}

</mosaic_0001>

<llo_original>
// kernel: tpu_custom_call.1
$region0: #{tpu_custom_call.1}
  #allocation0 [shape = 'u32[]', space=smem, size = 0x4, offset = 0x4, fixed_abs, tag = 'smem constant byte address 0x4 - core index']
  #allocation1 [shape = 'u32[144,128]{1,0:T(1,128)}', space=vmem, size = 0x12000, scoped, tag = 'internal scratch']
  #allocation2 [shape = 's32[1]{0}', space=sflag, size = 0x4, scoped, tag = 'scoped memory for tpu_custom_call.1']
  #allocation3 [shape = 'f32[1]{0:T(128)S(6)}', space=smem, size = 0x200, scoped, tag = 'prefetched SMEM operand 0']
  %s0 = inlined_call_operand.<no memory space> [shape: f32[1], index: 0, kind: input, shape index: {}]
  %s1 = inlined_call_operand.vmem [shape: bf16[8,32], index: 1, kind: input, shape index: {}]
  %s2 = inlined_call_operand.vmem [shape: bf16[128,32], index: 2, kind: input, shape index: {}]
  %s3 = inlined_call_operand.vmem [shape: f32[1,128], index: 3, kind: input, shape index: {}]
  %s4 = inlined_call_operand.hbm [shape: f32[8,128], index: 4, kind: output, shape index: {}]
  %s5 = sld [smem:[#allocation0]]
  $region30: #{tpu_custom_call.1} parent=0
    _
  %s7 = ssub.s32 1, %s5
  %s8 = scalar_select 0, %s7, %s5
  %9 = sst [smem:[#allocation3]] %s0
  $region1: #{tpu_custom_call.1} parent=0
    #allocation4 [shape = 'u8[4096]{0}', space=vmem, size = 0x1000, scoped, tag = 'output window, operand 0, single buffered']
    #allocation5 [shape = 's32[1]{0}', space=sflag, size = 0x4, scoped, tag = 'scoped memory for tpu_custom_call.1']
    %10 = vsyncpa [#allocation5], 0
    // Predicated region
    $region2: #{tpu_custom_call.1} parent=1 // pred_check
      _
    $region3: #{tpu_custom_call.1} parent=1 // pred_check_branch
      %12 = sbr.rel (0) target = $region5
    $region4: #{tpu_custom_call.1} parent=1 // pred_region
      _
    $region5: #{tpu_custom_call.1} parent=1 // pred_fallthru
      _
    // Predicated region
    $region6: #{tpu_custom_call.1} parent=1 // pred_check
      _
    $region7: #{tpu_custom_call.1} parent=1 // pred_check_branch
      %14 = sbr.rel (0) target = $region9
    $region8: #{tpu_custom_call.1} parent=1 // pred_region
      _
    $region9: #{tpu_custom_call.1} parent=1 // pred_fallthru
      _
    // Predicated region
    $region10: #{tpu_custom_call.1} parent=1 // pred_check
      _
    $region11: #{tpu_custom_call.1} parent=1 // pred_check_branch
      %16 = sbr.rel (0) target = $region13
    $region12: #{tpu_custom_call.1} parent=1 // pred_region
      _
    $region13: #{tpu_custom_call.1} parent=1 // pred_fallthru
      _
    %p18 = scmp.eq.s32.totalorder 0, 0
    // Predicated region
    $region14: #{tpu_custom_call.1} parent=1 // pred_check
      %p19 = pneg %p18
    $region15: #{tpu_custom_call.1} parent=1 // pred_check_branch
      %21 = sbr.rel (%p19) target = $region17
    $region16: #{tpu_custom_call.1} parent=1 // pred_region
      %22 = vst [vmem:[#allocation4] sm:$0xff] 0.0
    $region17: #{tpu_custom_call.1} parent=1 // pred_fallthru
      _
    %v23 = vld [vmem:[#allocation4] sm:$0xff]
    %v24 = vld [vmem:[%s1] sm:$0xf]
    %v25 = vld [vmem:[%s2] sm:$0xf]
    %v26 = vld [vmem:[%s2 + $0x4] sm:$0xf]
    %v27 = vld [vmem:[%s2 + $0x8] sm:$0xf]
    %v28 = vld [vmem:[%s2 + $0xc] sm:$0xf]
    %v29 = vld [vmem:[%s2 + $0x10] sm:$0xf]
    %v30 = vld [vmem:[%s2 + $0x14] sm:$0xf]
    %v31 = vld [vmem:[%s2 + $0x18] sm:$0xf]
    %v32 = vld [vmem:[%s2 + $0x1c] sm:$0xf]
    %v33 = vld [vmem:[%s2 + $0x20] sm:$0xf]
    %v34 = vld [vmem:[%s2 + $0x24] sm:$0xf]
    %v35 = vld [vmem:[%s2 + $0x28] sm:$0xf]
    %v36 = vld [vmem:[%s2 + $0x2c] sm:$0xf]
    %v37 = vld [vmem:[%s2 + $0x30] sm:$0xf]
    %v38 = vld [vmem:[%s2 + $0x34] sm:$0xf]
    %v39 = vld [vmem:[%s2 + $0x38] sm:$0xf]
    %v40 = vld [vmem:[%s2 + $0x3c] sm:$0xf]
    %v57 = vunpack.c.l.b16 %v25
    %v58 = vunpack.c.l.b16 %v26
    %v59 = vunpack.c.l.b16 %v27
    %v60 = vunpack.c.l.b16 %v28
    %v61 = vunpack.c.l.b16 %v29
    %v62 = vunpack.c.l.b16 %v30
    %v63 = vunpack.c.l.b16 %v31
    %v64 = vunpack.c.l.b16 %v32
    %v65 = vunpack.c.l.b16 %v33
    %v66 = vunpack.c.l.b16 %v34
    %v67 = vunpack.c.l.b16 %v35
    %v68 = vunpack.c.l.b16 %v36
    %v69 = vunpack.c.l.b16 %v37
    %v70 = vunpack.c.l.b16 %v38
    %v71 = vunpack.c.l.b16 %v39
    %v72 = vunpack.c.l.b16 %v40
    %v73 = vpack.c.b16 %v58, %v57
    %v74 = vpack.c.b16 %v60, %v59
    %v75 = vpack.c.b16 %v62, %v61
    %v76 = vpack.c.b16 %v64, %v63
    %v77 = vpack.c.b16 %v66, %v65
    %v78 = vpack.c.b16 %v68, %v67
    %v79 = vpack.c.b16 %v70, %v69
    %v80 = vpack.c.b16 %v72, %v71
    %vm81 = vcmask 261120
    %v83 = vsel %vm81, %v24, 0
    %v86 = vsel %vm81, %v73, 0
    %v89 = vsel %vm81, %v74, 0
    %v92 = vsel %vm81, %v75, 0
    %v95 = vsel %vm81, %v76, 0
    %v98 = vsel %vm81, %v77, 0
    %v101 = vsel %vm81, %v78, 0
    %v104 = vsel %vm81, %v79, 0
    %v107 = vsel %vm81, %v80, 0
    %109 = vmatprep.subr.bf16.mxu0 0
    %110 = vmatpush1.bf16.xpose.msra.mxu0 %v86
    %111 = vmatprep.subr.bf16.mxu0 0
    %112 = vmatpush1.bf16.xpose.msra.mxu0 %v89
    %113 = vmatprep.subr.bf16.mxu0 0
    %114 = vmatpush1.bf16.xpose.msra.mxu0 %v92
    %115 = vmatprep.subr.bf16.mxu0 0
    %116 = vmatpush1.bf16.xpose.msra.mxu0 %v95
    %117 = vmatprep.subr.bf16.mxu0 0
    %118 = vmatpush1.bf16.xpose.msra.mxu0 %v98
    %119 = vmatprep.subr.bf16.mxu0 0
    %120 = vmatpush1.bf16.xpose.msra.mxu0 %v101
    %121 = vmatprep.subr.bf16.mxu0 0
    %122 = vmatpush1.bf16.xpose.msra.mxu0 %v104
    %123 = vmatprep.subr.bf16.mxu0 0
    %124 = vmatpush1.bf16.xpose.msra.mxu0 %v107
    %125 = vmatprep.subr.bf16.mxu0 0
    %126 = vmatpush1.bf16.xpose.msra.mxu0 0
    %127 = vmatprep.subr.bf16.mxu0 0
    %128 = vmatpush1.bf16.xpose.msra.mxu0 0
    %129 = vmatprep.subr.bf16.mxu0 0
    %130 = vmatpush1.bf16.xpose.msra.mxu0 0
    %131 = vmatprep.subr.bf16.mxu0 0
    %132 = vmatpush1.bf16.xpose.msra.mxu0 0
    %133 = vmatprep.subr.bf16.mxu0 0
    %134 = vmatpush1.bf16.xpose.msra.mxu0 0
    %135 = vmatprep.subr.bf16.mxu0 0
    %136 = vmatpush1.bf16.xpose.msra.mxu0 0
    %137 = vmatprep.subr.bf16.mxu0 0
    %138 = vmatpush1.bf16.xpose.msra.mxu0 0
    %139 = vmatprep.subr.bf16.mxu0 0
    %140 = vmatpush1.bf16.xpose.msra.mxu0 0
    %141 = vmatprep.mubr.bf16.mxu0 0
    %142 = vmatmul.mubr.bf16.gmra.mrb[0].mxu0 %v83
    %v143 = vpop.f32.mrb[0].mxu0
    %v144 = vadd.f32 0.0, %v143
    %v145 = vpop.f32.mrb[0].mxu0
    %v146 = vpop.f32.mrb[0].mxu0
    %v147 = vpop.f32.mrb[0].mxu0
    %148 = vdwg.mxu0
    %v149 = vadd.f32 %v23, %v144
    %150 = vst [vmem:[#allocation4] sm:$0xff] %v149
    // Predicated region
    $region18: #{tpu_custom_call.1} parent=1 // pred_check
      %p151 = pneg %p18
    $region19: #{tpu_custom_call.1} parent=1 // pred_check_branch
      %153 = sbr.rel (%p151) target = $region21
    $region20: #{tpu_custom_call.1} parent=1 // pred_region
      %v154 = vld [vmem:[#allocation4] sm:$0xff]
      %s155 = sld [smem:[#allocation3]]
      %v156 = vstv %s155
      %v157 = vmul.f32 %v154, %v156
      %v158 = vld [vmem:[%s3] sm:$0x1]
      %v160 = vlaneseq
      %v161 = vshrl.u32 %v160, 7
      %v162 = vsub.s32 0, %v161
      %v163 = vrot.slane %v158, %v162
      %v165 = vadd.f32 %v157, %v163
      %166 = vst [vmem:[#allocation4] sm:$0xff] %v165
    $region21: #{tpu_custom_call.1} parent=1 // pred_fallthru
      _
    // Predicated region
    $region22: #{tpu_custom_call.1} parent=1 // pred_check
      _
    $region23: #{tpu_custom_call.1} parent=1 // pred_check_branch
      %168 = sbr.rel (0) target = $region25
    $region24: #{tpu_custom_call.1} parent=1 // pred_region
      %s170 = ssub.s32 128, 128
      %171 = vsyncadd [#allocation5], %s170
      %s173 = sshll.u32 [#allocation4], 4
      %s174 = int_to_ptr.vmem [resolvable:$true] %s173
      %176 = dma.vmem_to_hbm [thread:$0]  %s174, 128, %s4, [#allocation5]
    $region25: #{tpu_custom_call.1} parent=1 // pred_fallthru
      _
    // Predicated region
    $region26: #{tpu_custom_call.1} parent=1 // pred_check
      _
    $region27: #{tpu_custom_call.1} parent=1 // pred_check_branch
      %178 = sbr.rel (0) target = $region29
    $region28: #{tpu_custom_call.1} parent=1 // pred_region
      %179 = dma.done [#allocation5], 128
    $region29: #{tpu_custom_call.1} parent=1 // pred_fallthru
      _
    %180 = vsyncpa [#allocation5], 1

</llo_original>
